<compile_context>
chip_gen: v5e
topology: v5e:2x2
jax: 0.10.0
libtpu: 0.0.40
codegen_flags: <defaults>
</compile_context>

<pallas_src>
import jax
import jax.numpy as jnp
from jax import lax
from jax.experimental import pallas as pl
from jax.experimental.pallas import tpu as pltpu

EMBED = 32
HEADS = 4
HEAD_DIM = EMBED // HEADS
HIDDEN = 64
CLASSES = 3
OUT_ROWS = 8                 # CLASSES padded to one sublane group
BN_EPS = 1e-5

# ---- packed parameter slab: (136, 128) f32 = 68 KiB, DMA'd once -------------
SLAB_COLS = 128
COL_ROW = 0                  # rows 0..63: small per-feature columns, one lane each
LANE_ENC_W_EHR = 0           #   encoder weight column applied to x[:, 0]
LANE_ENC_W_IMG = 1           #   encoder weight column applied to x[:, 1]
LANE_ENC_B = 2               #   encoder bias column
LANE_MID_B = 3               #   folded mid-layer bias column (BN shift included)
LANE_OUT_B = 4               #   fusion[4] bias column (rows 0..2)
MID_W_ROW = 64               # rows 64..127, lanes 0..63 : W_mid^T (64, 64)
OUT_W_ROW = 128              # rows 128..135, lanes 0..63: W_out^T padded to (8, 64)
SLAB_ROWS = 136


def dual_transformer_kernel(xt_ref, w_ref, out_ref):
    """xt_ref: (2, TB) batch-on-lanes input; out_ref: (8, TB) logits^T (rows 3..7 zero)."""
    ehr = xt_ref[0:1, :]                                              # (1, TB)
    img = xt_ref[1:2, :]                                              # (1, TB)

    w0 = w_ref[COL_ROW:COL_ROW + HIDDEN, LANE_ENC_W_EHR:LANE_ENC_W_EHR + 1]   # (64, 1)
    w1 = w_ref[COL_ROW:COL_ROW + HIDDEN, LANE_ENC_W_IMG:LANE_ENC_W_IMG + 1]   # (64, 1)
    b_enc = w_ref[COL_ROW:COL_ROW + HIDDEN, LANE_ENC_B:LANE_ENC_B + 1]        # (64, 1)
    b_mid = w_ref[COL_ROW:COL_ROW + HIDDEN, LANE_MID_B:LANE_MID_B + 1]        # (64, 1)
    b_out = w_ref[COL_ROW:COL_ROW + OUT_ROWS, LANE_OUT_B:LANE_OUT_B + 1]      # (8, 1)

    # Encoder (both modalities): VPU outer-product broadcast + ReLU -> feat^T (64, TB).
    feat_t = jnp.maximum(w0 * ehr + w1 * img + b_enc, 0.0)

    # Folded V-proj -> MHA v_in -> out_proj -> fusion[0] -> BatchNorm: one K=64 matmul,
    # batch on the MXU N/lane axis.
    w_mid_t = w_ref[MID_W_ROW:MID_W_ROW + HIDDEN, 0:HIDDEN]                   # (64, 64)
    h_t = jnp.dot(w_mid_t, feat_t, preferred_element_type=jnp.float32) + b_mid
    h_t = jnp.maximum(h_t, 0.0)                                               # (64, TB)

    # fusion[4]: Linear(64, 3) padded to 8 output rows -> full lane-dense store.
    w_out_t = w_ref[OUT_W_ROW:OUT_W_ROW + OUT_ROWS, 0:HIDDEN]                 # (8, 64)
    out_ref[...] = jnp.dot(w_out_t, h_t, preferred_element_type=jnp.float32) + b_out


def dual_transformer_forward(x, w_packed, *, block_b=8192):
    """x: (B, 2) float32; w_packed: (SLAB_ROWS, SLAB_COLS) from fold_and_pack_params."""
    b = x.shape[0]
    block_b = max(128, (int(block_b) // 128) * 128)       # batch tile: multiple of 128
    b_lane = 128 * pl.cdiv(b, 128)
    tb = min(block_b, b_lane)
    b_pad = tb * pl.cdiv(b, tb)

    xt = jnp.transpose(x.astype(jnp.float32))             # (2, B): batch on lanes
    if b_pad != b:
        xt = jnp.pad(xt, ((0, 0), (0, b_pad - b)))

    flops = 2 * b_pad * HIDDEN * (HIDDEN + OUT_ROWS) + 4 * b_pad * HIDDEN
    bytes_accessed = (2 + OUT_ROWS) * b_pad * 4 + SLAB_ROWS * SLAB_COLS * 4

    out_t = pl.pallas_call(
        dual_transformer_kernel,
        out_shape=jax.ShapeDtypeStruct((OUT_ROWS, b_pad), jnp.float32),
        grid=(b_pad // tb,),
        in_specs=[
            pl.BlockSpec((2, tb), lambda i: (0, i)),
            pl.BlockSpec((SLAB_ROWS, SLAB_COLS), lambda i: (0, 0)),  # resident weights
        ],
        out_specs=pl.BlockSpec((OUT_ROWS, tb), lambda i: (0, i)),
        compiler_params=pltpu.CompilerParams(dimension_semantics=("parallel",)),
        cost_estimate=pl.CostEstimate(
            flops=flops, transcendentals=0, bytes_accessed=bytes_accessed),
    )(xt, w_packed)
    return jnp.transpose(out_t[:CLASSES, :b])


# -----------------------------------------------------------------------------
# Trace-time folding of the linear chain + packing into one VMEM slab.
# Takes the FULL original parameter list so the same params feed the reference.
# -----------------------------------------------------------------------------
def fold_and_pack_params(params):
    (ehr_w, ehr_b, img_w, img_b,
     aq_w, aq_b, ak_w, ak_b, av_w, av_b,
     bq_w, bq_b, bk_w, bk_b, bv_w, bv_b,
     m_wq, m_wk, m_wv, m_bq, m_bk, m_bv, m_wo, m_bo,
     f1_w, f1_b, bn_g, bn_beta, bn_mu, bn_var,
     f2_w, f2_b) = params
    del aq_w, aq_b, ak_w, ak_b, bq_w, bq_b, bk_w, bk_b, m_wq, m_wk, m_bq, m_bk  # dead

    hi = lax.Precision.HIGHEST

    def mm(a, b):
        return jnp.dot(a, b, precision=hi)

    # seq_len == 1 => softmax over one key == 1, so attention == out_proj(v_proj(V)).
    # ehr branch (Va) feeds img_ehr_attn -> second half of the concat -> f1_w[32:64].
    w_ehr = mm(mm(mm(av_w, m_wv), m_wo), f1_w[EMBED:2 * EMBED, :])                   # (32, 64)
    b_ehr = mm(mm(mm(av_b, m_wv) + m_bv, m_wo) + m_bo, f1_w[EMBED:2 * EMBED, :])     # (1, 64)
    # img branch (Vb) feeds ehr_img_attn -> first half of the concat -> f1_w[0:32].
    w_img = mm(mm(mm(bv_w, m_wv), m_wo), f1_w[0:EMBED, :])                           # (32, 64)
    b_img = mm(mm(mm(bv_b, m_wv) + m_bv, m_wo) + m_bo, f1_w[0:EMBED, :])             # (1, 64)

    # feat layout: rows 0:32 -> ehr_feat, rows 32:64 -> img_feat (transposed kernel).
    w_mid = jnp.concatenate([w_ehr, w_img], axis=0)                                  # (64, 64)
    b_mid = b_ehr + b_img + f1_b                                                     # (1, 64)

    # Fold eval-mode BatchNorm1d(64): y = z*scale + (beta - mu*scale).
    scale = bn_g * lax.rsqrt(bn_var + BN_EPS)
    shift = bn_beta - bn_mu * scale
    w_mid = w_mid * scale
    b_mid = b_mid * scale + shift

    zeros32 = jnp.zeros((EMBED,), jnp.float32)
    w0_col = jnp.concatenate([ehr_w[0], zeros32])            # encoder weight vs x[:, 0]
    w1_col = jnp.concatenate([zeros32, img_w[0]])            # encoder weight vs x[:, 1]
    b_enc_col = jnp.concatenate([ehr_b[0], img_b[0]])

    w_mid_t = w_mid.T                                         # (64, 64)
    b_mid_col = b_mid[0]                                      # (64,)
    w_out_t = jnp.pad(f2_w.T, ((0, OUT_ROWS - CLASSES), (0, 0)))   # (8, 64)
    b_out_col = jnp.pad(f2_b[0], (0, OUT_ROWS - CLASSES))          # (8,)

    slab = jnp.zeros((SLAB_ROWS, SLAB_COLS), jnp.float32)
    slab = slab.at[COL_ROW:COL_ROW + HIDDEN, LANE_ENC_W_EHR].set(w0_col)
    slab = slab.at[COL_ROW:COL_ROW + HIDDEN, LANE_ENC_W_IMG].set(w1_col)
    slab = slab.at[COL_ROW:COL_ROW + HIDDEN, LANE_ENC_B].set(b_enc_col)
    slab = slab.at[COL_ROW:COL_ROW + HIDDEN, LANE_MID_B].set(b_mid_col)
    slab = slab.at[COL_ROW:COL_ROW + OUT_ROWS, LANE_OUT_B].set(b_out_col)
    slab = slab.at[MID_W_ROW:MID_W_ROW + HIDDEN, 0:HIDDEN].set(w_mid_t)
    slab = slab.at[OUT_W_ROW:OUT_W_ROW + OUT_ROWS, 0:HIDDEN].set(w_out_t)
    return slab


# -----------------------------------------------------------------------------
# Deterministic parameter construction (shapes follow the nn.Module __init__).
# -----------------------------------------------------------------------------
def make_params(key):
    def nxt():
        nonlocal key
        key, sub = jax.random.split(key)
        return sub

    def w(shape, scale=0.1):
        return (scale * jax.random.normal(nxt(), shape)).astype(jnp.float32)

    params = [
        # ehr / img encoders: Linear(1, 32)
        w((1, EMBED)), w((1, EMBED)),
        w((1, EMBED)), w((1, EMBED)),
        # ehr_q / ehr_k / ehr_v: Linear(32, 32)
        w((EMBED, EMBED)), w((1, EMBED)),
        w((EMBED, EMBED)), w((1, EMBED)),
        w((EMBED, EMBED)), w((1, EMBED)),
        # img_q / img_k / img_v: Linear(32, 32)
        w((EMBED, EMBED)), w((1, EMBED)),
        w((EMBED, EMBED)), w((1, EMBED)),
        w((EMBED, EMBED)), w((1, EMBED)),
        # MultiheadAttention: in_proj split into Wq/Wk/Wv + biases, then out_proj.
        w((EMBED, EMBED)), w((EMBED, EMBED)), w((EMBED, EMBED)),
        w((1, EMBED)), w((1, EMBED)), w((1, EMBED)),
        w((EMBED, EMBED)), w((1, EMBED)),
        # fusion[0]: Linear(64, 64)
        w((2 * EMBED, HIDDEN)), w((1, HIDDEN)),
        # fusion[1]: BatchNorm1d(64) — PyTorch defaults: gamma=1, beta=0, mu=0, var=1
        jnp.ones((1, HIDDEN), jnp.float32), jnp.zeros((1, HIDDEN), jnp.float32),
        jnp.zeros((1, HIDDEN), jnp.float32), jnp.ones((1, HIDDEN), jnp.float32),
        # fusion[4]: Linear(64, 3)
        w((HIDDEN, CLASSES)), w((1, CLASSES)),
    ]
    return params


# -----------------------------------------------------------------------------
# Pure-JAX reference (full multi-head attention with explicit softmax) used to
# verify the kernel, including the seq_len==1 simplification and the folding.
# -----------------------------------------------------------------------------
def _ref_mha(q, k, v, wq, bq, wk, bk, wv, bv, wo, bo):
    b = q.shape[0]
    qp = (q @ wq + bq).reshape(b, 1, HEADS, HEAD_DIM).transpose(0, 2, 1, 3)
    kp = (k @ wk + bk).reshape(b, 1, HEADS, HEAD_DIM).transpose(0, 2, 1, 3)
    vp = (v @ wv + bv).reshape(b, 1, HEADS, HEAD_DIM).transpose(0, 2, 1, 3)
    scores = jnp.einsum("bhqd,bhkd->bhqk", qp, kp) / jnp.sqrt(float(HEAD_DIM))
    attn = jax.nn.softmax(scores, axis=-1)
    o = jnp.einsum("bhqk,bhkd->bhqd", attn, vp)
    o = o.transpose(0, 2, 1, 3).reshape(b, 1, EMBED)
    return o @ wo + bo


def ref_forward(x, params):
    (ehr_w, ehr_b, img_w, img_b,
     aq_w, aq_b, ak_w, ak_b, av_w, av_b,
     bq_w, bq_b, bk_w, bk_b, bv_w, bv_b,
     m_wq, m_wk, m_wv, m_bq, m_bk, m_bv, m_wo, m_bo,
     f1_w, f1_b, bn_g, bn_beta, bn_mu, bn_var,
     f2_w, f2_b) = params

    ehr = x[:, 0:1]
    img = x[:, 1:2]
    ehr_feat = jax.nn.relu(ehr @ ehr_w + ehr_b)[:, None, :]   # (B, 1, 32)
    img_feat = jax.nn.relu(img @ img_w + img_b)[:, None, :]

    Qa = ehr_feat @ aq_w + aq_b
    Ka = ehr_feat @ ak_w + ak_b
    Va = ehr_feat @ av_w + av_b
    Qb = img_feat @ bq_w + bq_b
    Kb = img_feat @ bk_w + bk_b
    Vb = img_feat @ bv_w + bv_b

    a = _ref_mha(Qa, Kb, Vb, m_wq, m_bq, m_wk, m_bk, m_wv, m_bv, m_wo, m_bo)
    b_ = _ref_mha(Qb, Ka, Va, m_wq, m_bq, m_wk, m_bk, m_wv, m_bv, m_wo, m_bo)

    ab = jnp.concatenate([a[:, 0, :], b_[:, 0, :]], axis=1)   # (B, 64)
    h = ab @ f1_w + f1_b
    h = (h - bn_mu) / jnp.sqrt(bn_var + BN_EPS) * bn_g + bn_beta
    h = jax.nn.relu(h)
    return h @ f2_w + f2_b


if __name__ == "__main__":
    key = jax.random.PRNGKey(0)
    k_x, k_p = jax.random.split(key)

    B = 259  # odd batch: exercises zero-padding and (with block_b=128) a 3-step grid
    x = jax.random.normal(k_x, (B, 2), dtype=jnp.float32)
    params = make_params(k_p)
    w_packed = fold_and_pack_params(params)   # one-time trace-time fold + pack

    out_single = jax.block_until_ready(dual_transformer_forward(x, w_packed))
    out_tiled = jax.block_until_ready(dual_transformer_forward(x, w_packed, block_b=128))

    with jax.default_matmul_precision("highest"):
        expected = jax.block_until_ready(ref_forward(x, params))

    assert out_single.shape == (B, CLASSES), out_single.shape
    for got in (out_single, out_tiled):
        err = float(jnp.max(jnp.abs(got - expected)))
        assert jnp.allclose(got, expected, atol=1e-4, rtol=1e-4), err

    print("KERNEL_OK")
</pallas_src>

<mosaic_0001>
module attributes {stable_mosaic.version = 11 : i64} {
  func.func @dual_transformer_kernel(%arg0: i32, %arg1: memref<2x384xf32, #tpu.memory_space<vmem>>, %arg2: memref<136x128xf32, #tpu.memory_space<vmem>>, %arg3: memref<8x384xf32, #tpu.memory_space<vmem>>) attributes {dimension_semantics = [#tpu.dimension_semantics<parallel>], iteration_bounds = array<i64: 1>, scalar_prefetch = 0 : i64, scratch_operands = 0 : i64, tpu.core_type = #tpu.core_type<tc>, window_params = [{transform_indices = @transform_0, window_bounds = array<i64: 2, 384>}, {pipeline_mode = #tpu.pipeline_mode<synchronous>, transform_indices = @transform_1, window_bounds = array<i64: 136, 128>}, {transform_indices = @transform_2, window_bounds = array<i64: 8, 384>}]} {
    %c0 = arith.constant 0 : index
    %c0_0 = arith.constant 0 : index
    %0 = vector.load %arg1[%c0, %c0_0] : memref<2x384xf32, #tpu.memory_space<vmem>>, vector<1x384xf32>
    %c1 = arith.constant 1 : index
    %c0_1 = arith.constant 0 : index
    %1 = vector.load %arg1[%c1, %c0_1] : memref<2x384xf32, #tpu.memory_space<vmem>>, vector<1x384xf32>
    %c0_2 = arith.constant 0 : index
    %c0_3 = arith.constant 0 : index
    %2 = vector.load %arg2[%c0_2, %c0_3] : memref<136x128xf32, #tpu.memory_space<vmem>>, vector<64x1xf32>
    %c0_4 = arith.constant 0 : index
    %c1_5 = arith.constant 1 : index
    %3 = vector.load %arg2[%c0_4, %c1_5] : memref<136x128xf32, #tpu.memory_space<vmem>>, vector<64x1xf32>
    %c0_6 = arith.constant 0 : index
    %c2 = arith.constant 2 : index
    %4 = vector.load %arg2[%c0_6, %c2] : memref<136x128xf32, #tpu.memory_space<vmem>>, vector<64x1xf32>
    %c0_7 = arith.constant 0 : index
    %c3 = arith.constant 3 : index
    %5 = vector.load %arg2[%c0_7, %c3] : memref<136x128xf32, #tpu.memory_space<vmem>>, vector<64x1xf32>
    %c0_8 = arith.constant 0 : index
    %c4 = arith.constant 4 : index
    %6 = vector.load %arg2[%c0_8, %c4] : memref<136x128xf32, #tpu.memory_space<vmem>>, vector<8x1xf32>
    %7 = vector.broadcast %2 : vector<64x1xf32> to vector<64x384xf32>
    %8 = vector.broadcast %0 : vector<1x384xf32> to vector<64x384xf32>
    %9 = arith.mulf %7, %8 : vector<64x384xf32>
    %10 = vector.broadcast %3 : vector<64x1xf32> to vector<64x384xf32>
    %11 = vector.broadcast %1 : vector<1x384xf32> to vector<64x384xf32>
    %12 = arith.mulf %10, %11 : vector<64x384xf32>
    %13 = arith.addf %9, %12 : vector<64x384xf32>
    %14 = vector.broadcast %4 : vector<64x1xf32> to vector<64x384xf32>
    %15 = arith.addf %13, %14 : vector<64x384xf32>
    %cst = arith.constant 0.000000e+00 : f32
    %16 = vector.broadcast %cst : f32 to vector<64x384xf32>
    %17 = arith.maximumf %15, %16 : vector<64x384xf32>
    %c64 = arith.constant 64 : index
    %c0_9 = arith.constant 0 : index
    %18 = vector.load %arg2[%c64, %c0_9] : memref<136x128xf32, #tpu.memory_space<vmem>>, vector<64x64xf32>
    %cst_10 = arith.constant dense<0.000000e+00> : vector<64x384xf32>
    %19 = tpu.matmul %18, %17, %cst_10 {dimension_numbers = #tpu.dot_dimension_numbers<[1], [0], [0], [1], [0, 0, 1, 1], [], []>} : vector<64x64xf32>, vector<64x384xf32>, vector<64x384xf32> -> vector<64x384xf32>
    %20 = vector.broadcast %5 : vector<64x1xf32> to vector<64x384xf32>
    %21 = arith.addf %19, %20 : vector<64x384xf32>
    %cst_11 = arith.constant 0.000000e+00 : f32
    %22 = vector.broadcast %cst_11 : f32 to vector<64x384xf32>
    %23 = arith.maximumf %21, %22 : vector<64x384xf32>
    %c128 = arith.constant 128 : index
    %c0_12 = arith.constant 0 : index
    %24 = vector.load %arg2[%c128, %c0_12] : memref<136x128xf32, #tpu.memory_space<vmem>>, vector<8x64xf32>
    %cst_13 = arith.constant dense<0.000000e+00> : vector<8x384xf32>
    %25 = tpu.matmul %24, %23, %cst_13 {dimension_numbers = #tpu.dot_dimension_numbers<[1], [0], [0], [1], [0, 0, 1, 1], [], []>} : vector<8x64xf32>, vector<64x384xf32>, vector<8x384xf32> -> vector<8x384xf32>
    %26 = vector.broadcast %6 : vector<8x1xf32> to vector<8x384xf32>
    %27 = arith.addf %25, %26 : vector<8x384xf32>
    %c0_14 = arith.constant 0 : index
    %c0_15 = arith.constant 0 : index
    %28 = vector.load %arg3[%c0_14, %c0_15] : memref<8x384xf32, #tpu.memory_space<vmem>>, vector<8x384xf32>
    tpu.vector_store %arg3[%c0_14, %c0_15], %27 {strides = array<i32>} : memref<8x384xf32, #tpu.memory_space<vmem>>, vector<8x384xf32>,
    return
  }
  func.func @transform_0(%arg0: i32) -> (i32, i32) {
    %c0_i32 = arith.constant 0 : i32
    %c0_i32_0 = arith.constant 0 : i32
    return %c0_i32, %arg0 : i32, i32
  }
  func.func @transform_1(%arg0: i32) -> (i32, i32) {
    %c0_i32 = arith.constant 0 : i32
    %c0_i32_0 = arith.constant 0 : i32
    %c0_i32_1 = arith.constant 0 : i32
    return %c0_i32, %c0_i32_0 : i32, i32
  }
  func.func @transform_2(%arg0: i32) -> (i32, i32) {
    %c0_i32 = arith.constant 0 : i32
    %c0_i32_0 = arith.constant 0 : i32
    return %c0_i32, %arg0 : i32, i32
  }
}

</mosaic_0001>

<llo_original>
// kernel: tpu_custom_call.1
$region0: #{tpu_custom_call.1}
  #allocation0 [shape = 'u32[]', space=smem, size = 0x4, offset = 0x4, fixed_abs, tag = 'smem constant byte address 0x4 - core index']
  #allocation1 [shape = 'u32[72,128]{1,0:T(1,128)}', space=vmem, size = 0x9000, scoped, tag = 'internal scratch']
  %s0 = inlined_call_operand.hbm [shape: f32[2,384], index: 0, kind: input, shape index: {}]
  %s1 = inlined_call_operand.hbm [shape: f32[136,128], index: 1, kind: input, shape index: {}]
  %s2 = inlined_call_operand.hbm [shape: f32[8,384], index: 2, kind: output, shape index: {}]
  %s3 = sld [smem:[#allocation0]]
  $region26: #{tpu_custom_call.1} parent=0
    _
  %s5 = ssub.s32 1, %s3
  %s6 = scalar_select 0, %s5, %s3
  $region1: #{tpu_custom_call.1} parent=0
    #allocation2 [shape = 'u8[3072]{0}', space=vmem, size = 0xc00, scoped, tag = 'input window, operand 0, single buffered']
    #allocation3 [shape = 's32[1]{0}', space=sflag, size = 0x4, scoped, tag = 'scoped memory for tpu_custom_call.1']
    #allocation4 [shape = 's32[1]{0}', space=sflag, size = 0x4, scoped, tag = 'scoped memory for tpu_custom_call.1']
    #allocation5 [shape = 'u8[69632]{0}', space=vmem, size = 0x11000, scoped, tag = 'input window, operand 1, single buffered']
    #allocation6 [shape = 's32[1]{0}', space=sflag, size = 0x4, scoped, tag = 'scoped memory for tpu_custom_call.1']
    #allocation7 [shape = 'u8[12288]{0}', space=vmem, size = 0x3000, scoped, tag = 'output window, operand 0, single buffered']
    %7 = vsyncpa [#allocation3], 0
    %8 = vsyncpa [#allocation6], 0
    %9 = vsyncpa [#allocation4], 0
    // Predicated region
    $region2: #{tpu_custom_call.1} parent=1 // pred_check
      _
    $region3: #{tpu_custom_call.1} parent=1 // pred_check_branch
      %11 = sbr.rel (0) target = $region5
    $region4: #{tpu_custom_call.1} parent=1 // pred_region
      %13 = vsyncadd [#allocation3], 0
      %s15 = sshll.u32 %s0, 4
      %s16 = int_to_ptr.hbm [resolvable:$true] %s15
      %s17 = sshll.u32 [#allocation2], 4
      %s18 = int_to_ptr.vmem [resolvable:$true] %s17
      %20 = dma.hbm_to_vmem [thread:$0]  %s16, 96, %s18, [#allocation3]
    $region5: #{tpu_custom_call.1} parent=1 // pred_fallthru
      _
    // Predicated region
    $region6: #{tpu_custom_call.1} parent=1 // pred_check
      _
    $region7: #{tpu_custom_call.1} parent=1 // pred_check_branch
      %22 = sbr.rel (0) target = $region9
    $region8: #{tpu_custom_call.1} parent=1 // pred_region
      %24 = vsyncadd [#allocation6], 0
      %s25 = sshll.u32 %s1, 4
      %s26 = int_to_ptr.hbm [resolvable:$true] %s25
      %s27 = sshll.u32 [#allocation5], 4
      %s28 = int_to_ptr.vmem [resolvable:$true] %s27
      %33 = dma.hbm_to_vmem [thread:$0]  %s26, 2176, %s28, [#allocation6], 128, 128, 8
    $region9: #{tpu_custom_call.1} parent=1 // pred_fallthru
      _
    // Predicated region
    $region10: #{tpu_custom_call.1} parent=1 // pred_check
      _
    $region11: #{tpu_custom_call.1} parent=1 // pred_check_branch
      %35 = sbr.rel (0) target = $region13
    $region12: #{tpu_custom_call.1} parent=1 // pred_region
      %37 = dma.done [#allocation3], 96
    $region13: #{tpu_custom_call.1} parent=1 // pred_fallthru
      _
    // Predicated region
    $region14: #{tpu_custom_call.1} parent=1 // pred_check
      _
    $region15: #{tpu_custom_call.1} parent=1 // pred_check_branch
      %39 = sbr.rel (0) target = $region17
    $region16: #{tpu_custom_call.1} parent=1 // pred_region
      %41 = dma.done [#allocation6], 2176
    $region17: #{tpu_custom_call.1} parent=1 // pred_fallthru
      _
    %v42 = vld [vmem:[#allocation2] ss:$2 sm:$0x7]
    %s43 = scalar_lea.vmem [#allocation2], 1
    %v44 = vld [vmem:[%s43] ss:$2 sm:$0x7]
    %v45 = vld [vmem:[#allocation5] sm:$0xff]
    %v46 = vld [vmem:[#allocation5 + $0x8] sm:$0xff]
    %v47 = vld [vmem:[#allocation5 + $0x10] sm:$0xff]
    %v48 = vld [vmem:[#allocation5 + $0x18] sm:$0xff]
    %v49 = vld [vmem:[#allocation5 + $0x20] sm:$0xff]
    %v50 = vld [vmem:[#allocation5 + $0x28] sm:$0xff]
    %v51 = vld [vmem:[#allocation5 + $0x30] sm:$0xff]
    %v52 = vld [vmem:[#allocation5 + $0x38] sm:$0xff]
    %54 = vset.pattern.permute.xlu0 0
    %55 = vperm.xlu0 %54, %v45
    %v56 = vpop.permute.xlu0 %55
    %59 = vset.pattern.permute.xlu0 0
    %60 = vperm.xlu0 %59, %v46
    %v61 = vpop.permute.xlu0 %60
    %64 = vset.pattern.permute.xlu0 0
    %65 = vperm.xlu0 %64, %v47
    %v66 = vpop.permute.xlu0 %65
    %69 = vset.pattern.permute.xlu0 0
    %70 = vperm.xlu0 %69, %v48
    %v71 = vpop.permute.xlu0 %70
    %74 = vset.pattern.permute.xlu0 0
    %75 = vperm.xlu0 %74, %v49
    %v76 = vpop.permute.xlu0 %75
    %79 = vset.pattern.permute.xlu0 0
    %80 = vperm.xlu0 %79, %v50
    %v81 = vpop.permute.xlu0 %80
    %84 = vset.pattern.permute.xlu0 0
    %85 = vperm.xlu0 %84, %v51
    %v86 = vpop.permute.xlu0 %85
    %89 = vset.pattern.permute.xlu0 0
    %90 = vperm.xlu0 %89, %v52
    %v91 = vpop.permute.xlu0 %90
    %v94 = vperm.slane %v42, 0
    %v95 = vperm.slane %v42, 1
    %v96 = vperm.slane %v42, 2
    %v100 = vmul.f32 %v56, %v94
    %v101 = vmul.f32 %v56, %v95
    %v102 = vmul.f32 %v56, %v96
    %v103 = vmul.f32 %v61, %v94
    %v104 = vmul.f32 %v61, %v95
    %v105 = vmul.f32 %v61, %v96
    %v106 = vmul.f32 %v66, %v94
    %v107 = vmul.f32 %v66, %v95
    %v108 = vmul.f32 %v66, %v96
    %v109 = vmul.f32 %v71, %v94
    %v110 = vmul.f32 %v71, %v95
    %v111 = vmul.f32 %v71, %v96
    %v112 = vmul.f32 %v76, %v94
    %v113 = vmul.f32 %v76, %v95
    %v114 = vmul.f32 %v76, %v96
    %v115 = vmul.f32 %v81, %v94
    %v116 = vmul.f32 %v81, %v95
    %v117 = vmul.f32 %v81, %v96
    %v118 = vmul.f32 %v86, %v94
    %v119 = vmul.f32 %v86, %v95
    %v120 = vmul.f32 %v86, %v96
    %v121 = vmul.f32 %v91, %v94
    %v122 = vmul.f32 %v91, %v95
    %v123 = vmul.f32 %v91, %v96
    %124 = vset.pattern.permute.xlu0 1
    %125 = vperm.xlu0 %124, %v45
    %v126 = vpop.permute.xlu0 %125
    %128 = vset.pattern.permute.xlu0 1
    %129 = vperm.xlu0 %128, %v46
    %v130 = vpop.permute.xlu0 %129
    %132 = vset.pattern.permute.xlu0 1
    %133 = vperm.xlu0 %132, %v47
    %v134 = vpop.permute.xlu0 %133
    %136 = vset.pattern.permute.xlu0 1
    %137 = vperm.xlu0 %136, %v48
    %v138 = vpop.permute.xlu0 %137
    %140 = vset.pattern.permute.xlu0 1
    %141 = vperm.xlu0 %140, %v49
    %v142 = vpop.permute.xlu0 %141
    %144 = vset.pattern.permute.xlu0 1
    %145 = vperm.xlu0 %144, %v50
    %v146 = vpop.permute.xlu0 %145
    %148 = vset.pattern.permute.xlu0 1
    %149 = vperm.xlu0 %148, %v51
    %v150 = vpop.permute.xlu0 %149
    %152 = vset.pattern.permute.xlu0 1
    %153 = vperm.xlu0 %152, %v52
    %v154 = vpop.permute.xlu0 %153
    %v157 = vperm.slane %v44, 0
    %v158 = vperm.slane %v44, 1
    %v159 = vperm.slane %v44, 2
    %v163 = vmul.f32 %v126, %v157
    %v164 = vmul.f32 %v126, %v158
    %v165 = vmul.f32 %v126, %v159
    %v166 = vmul.f32 %v130, %v157
    %v167 = vmul.f32 %v130, %v158
    %v168 = vmul.f32 %v130, %v159
    %v169 = vmul.f32 %v134, %v157
    %v170 = vmul.f32 %v134, %v158
    %v171 = vmul.f32 %v134, %v159
    %v172 = vmul.f32 %v138, %v157
    %v173 = vmul.f32 %v138, %v158
    %v174 = vmul.f32 %v138, %v159
    %v175 = vmul.f32 %v142, %v157
    %v176 = vmul.f32 %v142, %v158
    %v177 = vmul.f32 %v142, %v159
    %v178 = vmul.f32 %v146, %v157
    %v179 = vmul.f32 %v146, %v158
    %v180 = vmul.f32 %v146, %v159
    %v181 = vmul.f32 %v150, %v157
    %v182 = vmul.f32 %v150, %v158
    %v183 = vmul.f32 %v150, %v159
    %v184 = vmul.f32 %v154, %v157
    %v185 = vmul.f32 %v154, %v158
    %v186 = vmul.f32 %v154, %v159
    %v187 = vadd.f32 %v100, %v163
    %v188 = vadd.f32 %v101, %v164
    %v189 = vadd.f32 %v102, %v165
    %v190 = vadd.f32 %v103, %v166
    %v191 = vadd.f32 %v104, %v167
    %v192 = vadd.f32 %v105, %v168
    %v193 = vadd.f32 %v106, %v169
    %v194 = vadd.f32 %v107, %v170
    %v195 = vadd.f32 %v108, %v171
    %v196 = vadd.f32 %v109, %v172
    %v197 = vadd.f32 %v110, %v173
    %v198 = vadd.f32 %v111, %v174
    %v199 = vadd.f32 %v112, %v175
    %v200 = vadd.f32 %v113, %v176
    %v201 = vadd.f32 %v114, %v177
    %v202 = vadd.f32 %v115, %v178
    %v203 = vadd.f32 %v116, %v179
    %v204 = vadd.f32 %v117, %v180
    %v205 = vadd.f32 %v118, %v181
    %v206 = vadd.f32 %v119, %v182
    %v207 = vadd.f32 %v120, %v183
    %v208 = vadd.f32 %v121, %v184
    %v209 = vadd.f32 %v122, %v185
    %v210 = vadd.f32 %v123, %v186
    %211 = vset.pattern.permute.xlu0 2
    %212 = vperm.xlu0 %211, %v45
    %v213 = vpop.permute.xlu0 %212
    %215 = vset.pattern.permute.xlu0 2
    %216 = vperm.xlu0 %215, %v46
    %v217 = vpop.permute.xlu0 %216
    %219 = vset.pattern.permute.xlu0 2
    %220 = vperm.xlu0 %219, %v47
    %v221 = vpop.permute.xlu0 %220
    %223 = vset.pattern.permute.xlu0 2
    %224 = vperm.xlu0 %223, %v48
    %v225 = vpop.permute.xlu0 %224
    %227 = vset.pattern.permute.xlu0 2
    %228 = vperm.xlu0 %227, %v49
    %v229 = vpop.permute.xlu0 %228
    %231 = vset.pattern.permute.xlu0 2
    %232 = vperm.xlu0 %231, %v50
    %v233 = vpop.permute.xlu0 %232
    %235 = vset.pattern.permute.xlu0 2
    %236 = vperm.xlu0 %235, %v51
    %v237 = vpop.permute.xlu0 %236
    %239 = vset.pattern.permute.xlu0 2
    %240 = vperm.xlu0 %239, %v52
    %v241 = vpop.permute.xlu0 %240
    %v243 = vadd.f32 %v187, %v213
    %v244 = vadd.f32 %v188, %v213
    %v245 = vadd.f32 %v189, %v213
    %v246 = vadd.f32 %v190, %v217
    %v247 = vadd.f32 %v191, %v217
    %v248 = vadd.f32 %v192, %v217
    %v249 = vadd.f32 %v193, %v221
    %v250 = vadd.f32 %v194, %v221
    %v251 = vadd.f32 %v195, %v221
    %v252 = vadd.f32 %v196, %v225
    %v253 = vadd.f32 %v197, %v225
    %v254 = vadd.f32 %v198, %v225
    %v255 = vadd.f32 %v199, %v229
    %v256 = vadd.f32 %v200, %v229
    %v257 = vadd.f32 %v201, %v229
    %v258 = vadd.f32 %v202, %v233
    %v259 = vadd.f32 %v203, %v233
    %v260 = vadd.f32 %v204, %v233
    %v261 = vadd.f32 %v205, %v237
    %v262 = vadd.f32 %v206, %v237
    %v263 = vadd.f32 %v207, %v237
    %v264 = vadd.f32 %v208, %v241
    %v265 = vadd.f32 %v209, %v241
    %v266 = vadd.f32 %v210, %v241
    %v267 = vmax.f32 %v243, 0.0
    %v268 = vmax.f32 %v244, 0.0
    %v269 = vmax.f32 %v245, 0.0
    %v270 = vmax.f32 %v246, 0.0
    %v271 = vmax.f32 %v247, 0.0
    %v272 = vmax.f32 %v248, 0.0
    %v273 = vmax.f32 %v249, 0.0
    %v274 = vmax.f32 %v250, 0.0
    %v275 = vmax.f32 %v251, 0.0
    %v276 = vmax.f32 %v252, 0.0
    %v277 = vmax.f32 %v253, 0.0
    %v278 = vmax.f32 %v254, 0.0
    %v279 = vmax.f32 %v255, 0.0
    %v280 = vmax.f32 %v256, 0.0
    %v281 = vmax.f32 %v257, 0.0
    %v282 = vmax.f32 %v258, 0.0
    %v283 = vmax.f32 %v259, 0.0
    %v284 = vmax.f32 %v260, 0.0
    %v285 = vmax.f32 %v261, 0.0
    %v286 = vmax.f32 %v262, 0.0
    %v287 = vmax.f32 %v263, 0.0
    %v288 = vmax.f32 %v264, 0.0
    %v289 = vmax.f32 %v265, 0.0
    %v290 = vmax.f32 %v266, 0.0
    %v291 = vld [vmem:[#allocation5 + $0x40] sm:$0xff]
    %v292 = vld [vmem:[#allocation5 + $0x48] sm:$0xff]
    %v293 = vld [vmem:[#allocation5 + $0x50] sm:$0xff]
    %v294 = vld [vmem:[#allocation5 + $0x58] sm:$0xff]
    %v295 = vld [vmem:[#allocation5 + $0x60] sm:$0xff]
    %v296 = vld [vmem:[#allocation5 + $0x68] sm:$0xff]
    %v297 = vld [vmem:[#allocation5 + $0x70] sm:$0xff]
    %v298 = vld [vmem:[#allocation5 + $0x78] sm:$0xff]
    %299 = vset.pattern.permute.xlu0 3
    %300 = vperm.xlu0 %299, %v45
    %v301 = vpop.permute.xlu0 %300
    %303 = vset.pattern.permute.xlu0 3
    %304 = vperm.xlu0 %303, %v46
    %v305 = vpop.permute.xlu0 %304
    %307 = vset.pattern.permute.xlu0 3
    %308 = vperm.xlu0 %307, %v47
    %v309 = vpop.permute.xlu0 %308
    %311 = vset.pattern.permute.xlu0 3
    %312 = vperm.xlu0 %311, %v48
    %v313 = vpop.permute.xlu0 %312
    %315 = vset.pattern.permute.xlu0 3
    %316 = vperm.xlu0 %315, %v49
    %v317 = vpop.permute.xlu0 %316
    %319 = vset.pattern.permute.xlu0 3
    %320 = vperm.xlu0 %319, %v50
    %v321 = vpop.permute.xlu0 %320
    %323 = vset.pattern.permute.xlu0 3
    %324 = vperm.xlu0 %323, %v51
    %v325 = vpop.permute.xlu0 %324
    %327 = vset.pattern.permute.xlu0 3
    %328 = vperm.xlu0 %327, %v52
    %v329 = vpop.permute.xlu0 %328
    %vm331 = vcmask 523264
    %v333 = vsel %vm331, %v291, 0
    %v336 = vsel %vm331, %v292, 0
    %v339 = vsel %vm331, %v293, 0
    %v342 = vsel %vm331, %v294, 0
    %v345 = vsel %vm331, %v295, 0
    %v348 = vsel %vm331, %v296, 0
    %v351 = vsel %vm331, %v297, 0
    %v354 = vsel %vm331, %v298, 0
    %356 = vmatpush.msra.mxu0 0.0
    %357 = vmatpush.msra.mxu0 0.0
    %358 = vmatpush.msra.mxu0 0.0
    %359 = vmatpush.msra.mxu0 0.0
    %360 = vmatpush.msra.mxu0 0.0
    %361 = vmatpush.msra.mxu0 0.0
    %362 = vmatpush.msra.mxu0 0.0
    %363 = vmatpush.msra.mxu0 0.0
    %364 = vmatpush.msra.mxu0 %v288
    %365 = vmatpush.msra.mxu0 %v285
    %366 = vmatpush.msra.mxu0 %v282
    %367 = vmatpush.msra.mxu0 %v279
    %368 = vmatpush.msra.mxu0 %v276
    %369 = vmatpush.msra.mxu0 %v273
    %370 = vmatpush.msra.mxu0 %v270
    %371 = vmatpush.msra.mxu0 %v267
    %372 = vmatmul.f32.gmra.mxu0 %v333
    %v373 = vpop.f32.mrf.mxu0
    %v374 = vadd.f32 %v301, %v373
    %375 = vmatmul.f32.gmra.mxu0 %v336
    %v376 = vpop.f32.mrf.mxu0
    %v377 = vadd.f32 %v305, %v376
    %378 = vmatmul.f32.gmra.mxu0 %v339
    %v379 = vpop.f32.mrf.mxu0
    %v380 = vadd.f32 %v309, %v379
    %381 = vmatmul.f32.gmra.mxu0 %v342
    %v382 = vpop.f32.mrf.mxu0
    %v383 = vadd.f32 %v313, %v382
    %384 = vmatmul.f32.gmra.mxu0 %v345
    %v385 = vpop.f32.mrf.mxu0
    %v386 = vadd.f32 %v317, %v385
    %387 = vmatmul.f32.gmra.mxu0 %v348
    %v388 = vpop.f32.mrf.mxu0
    %v389 = vadd.f32 %v321, %v388
    %390 = vmatmul.f32.gmra.mxu0 %v351
    %v391 = vpop.f32.mrf.mxu0
    %v392 = vadd.f32 %v325, %v391
    %393 = vmatmul.f32.gmra.mxu0 %v354
    %v394 = vpop.f32.mrf.mxu0
    %v395 = vadd.f32 %v329, %v394
    %396 = vdwg.mxu0
    %397 = vmatpush.msra.mxu0 0.0
    %398 = vmatpush.msra.mxu0 0.0
    %399 = vmatpush.msra.mxu0 0.0
    %400 = vmatpush.msra.mxu0 0.0
    %401 = vmatpush.msra.mxu0 0.0
    %402 = vmatpush.msra.mxu0 0.0
    %403 = vmatpush.msra.mxu0 0.0
    %404 = vmatpush.msra.mxu0 0.0
    %405 = vmatpush.msra.mxu0 %v289
    %406 = vmatpush.msra.mxu0 %v286
    %407 = vmatpush.msra.mxu0 %v283
    %408 = vmatpush.msra.mxu0 %v280
    %409 = vmatpush.msra.mxu0 %v277
    %410 = vmatpush.msra.mxu0 %v274
    %411 = vmatpush.msra.mxu0 %v271
    %412 = vmatpush.msra.mxu0 %v268
    %413 = vmatmul.f32.gmra.mxu0 %v333
    %v414 = vpop.f32.mrf.mxu0
    %v415 = vadd.f32 %v301, %v414
    %416 = vmatmul.f32.gmra.mxu0 %v336
    %v417 = vpop.f32.mrf.mxu0
    %v418 = vadd.f32 %v305, %v417
    %419 = vmatmul.f32.gmra.mxu0 %v339
    %v420 = vpop.f32.mrf.mxu0
    %v421 = vadd.f32 %v309, %v420
    %422 = vmatmul.f32.gmra.mxu0 %v342
    %v423 = vpop.f32.mrf.mxu0
    %v424 = vadd.f32 %v313, %v423
    %425 = vmatmul.f32.gmra.mxu0 %v345
    %v426 = vpop.f32.mrf.mxu0
    %v427 = vadd.f32 %v317, %v426
    %428 = vmatmul.f32.gmra.mxu0 %v348
    %v429 = vpop.f32.mrf.mxu0
    %v430 = vadd.f32 %v321, %v429
    %431 = vmatmul.f32.gmra.mxu0 %v351
    %v432 = vpop.f32.mrf.mxu0
    %v433 = vadd.f32 %v325, %v432
    %434 = vmatmul.f32.gmra.mxu0 %v354
    %v435 = vpop.f32.mrf.mxu0
    %v436 = vadd.f32 %v329, %v435
    %437 = vdwg.mxu0
    %438 = vmatpush.msra.mxu0 0.0
    %439 = vmatpush.msra.mxu0 0.0
    %440 = vmatpush.msra.mxu0 0.0
    %441 = vmatpush.msra.mxu0 0.0
    %442 = vmatpush.msra.mxu0 0.0
    %443 = vmatpush.msra.mxu0 0.0
    %444 = vmatpush.msra.mxu0 0.0
    %445 = vmatpush.msra.mxu0 0.0
    %446 = vmatpush.msra.mxu0 %v290
    %447 = vmatpush.msra.mxu0 %v287
    %448 = vmatpush.msra.mxu0 %v284
    %449 = vmatpush.msra.mxu0 %v281
    %450 = vmatpush.msra.mxu0 %v278
    %451 = vmatpush.msra.mxu0 %v275
    %452 = vmatpush.msra.mxu0 %v272
    %453 = vmatpush.msra.mxu0 %v269
    %454 = vmatmul.f32.gmra.mxu0 %v333
    %v455 = vpop.f32.mrf.mxu0
    %v456 = vadd.f32 %v301, %v455
    %457 = vmatmul.f32.gmra.mxu0 %v336
    %v458 = vpop.f32.mrf.mxu0
    %v459 = vadd.f32 %v305, %v458
    %460 = vmatmul.f32.gmra.mxu0 %v339
    %v461 = vpop.f32.mrf.mxu0
    %v462 = vadd.f32 %v309, %v461
    %463 = vmatmul.f32.gmra.mxu0 %v342
    %v464 = vpop.f32.mrf.mxu0
    %v465 = vadd.f32 %v313, %v464
    %466 = vmatmul.f32.gmra.mxu0 %v345
    %v467 = vpop.f32.mrf.mxu0
    %v468 = vadd.f32 %v317, %v467
    %469 = vmatmul.f32.gmra.mxu0 %v348
    %v470 = vpop.f32.mrf.mxu0
    %v471 = vadd.f32 %v321, %v470
    %472 = vmatmul.f32.gmra.mxu0 %v351
    %v473 = vpop.f32.mrf.mxu0
    %v474 = vadd.f32 %v325, %v473
    %475 = vmatmul.f32.gmra.mxu0 %v354
    %v476 = vpop.f32.mrf.mxu0
    %v477 = vadd.f32 %v329, %v476
    %478 = vdwg.mxu0
    %v479 = vmax.f32 %v374, 0.0
    %v480 = vmax.f32 %v415, 0.0
    %v481 = vmax.f32 %v456, 0.0
    %v482 = vmax.f32 %v377, 0.0
    %v483 = vmax.f32 %v418, 0.0
    %v484 = vmax.f32 %v459, 0.0
    %v485 = vmax.f32 %v380, 0.0
    %v486 = vmax.f32 %v421, 0.0
    %v487 = vmax.f32 %v462, 0.0
    %v488 = vmax.f32 %v383, 0.0
    %v489 = vmax.f32 %v424, 0.0
    %v490 = vmax.f32 %v465, 0.0
    %v491 = vmax.f32 %v386, 0.0
    %v492 = vmax.f32 %v427, 0.0
    %v493 = vmax.f32 %v468, 0.0
    %v494 = vmax.f32 %v389, 0.0
    %v495 = vmax.f32 %v430, 0.0
    %v496 = vmax.f32 %v471, 0.0
    %v497 = vmax.f32 %v392, 0.0
    %v498 = vmax.f32 %v433, 0.0
    %v499 = vmax.f32 %v474, 0.0
    %v500 = vmax.f32 %v395, 0.0
    %v501 = vmax.f32 %v436, 0.0
    %v502 = vmax.f32 %v477, 0.0
    %v503 = vld [vmem:[#allocation5 + $0x80] sm:$0xff]
    %504 = vset.pattern.permute.xlu0 4
    %505 = vperm.xlu0 %504, %v45
    %v506 = vpop.permute.xlu0 %505
    %v509 = vsel %vm331, %v503, 0
    %511 = vmatpush.msra.mxu0 0.0
    %512 = vmatpush.msra.mxu0 0.0
    %513 = vmatpush.msra.mxu0 0.0
    %514 = vmatpush.msra.mxu0 0.0
    %515 = vmatpush.msra.mxu0 0.0
    %516 = vmatpush.msra.mxu0 0.0
    %517 = vmatpush.msra.mxu0 0.0
    %518 = vmatpush.msra.mxu0 0.0
    %519 = vmatpush.msra.mxu0 %v500
    %520 = vmatpush.msra.mxu0 %v497
    %521 = vmatpush.msra.mxu0 %v494
    %522 = vmatpush.msra.mxu0 %v491
    %523 = vmatpush.msra.mxu0 %v488
    %524 = vmatpush.msra.mxu0 %v485
    %525 = vmatpush.msra.mxu0 %v482
    %526 = vmatpush.msra.mxu0 %v479
    %527 = vmatmul.f32.gmra.mxu0 %v509
    %v528 = vpop.f32.mrf.mxu0
    %v529 = vadd.f32 %v506, %v528
    %530 = vdwg.mxu0
    %531 = vmatpush.msra.mxu0 0.0
    %532 = vmatpush.msra.mxu0 0.0
    %533 = vmatpush.msra.mxu0 0.0
    %534 = vmatpush.msra.mxu0 0.0
    %535 = vmatpush.msra.mxu0 0.0
    %536 = vmatpush.msra.mxu0 0.0
    %537 = vmatpush.msra.mxu0 0.0
    %538 = vmatpush.msra.mxu0 0.0
    %539 = vmatpush.msra.mxu0 %v501
    %540 = vmatpush.msra.mxu0 %v498
    %541 = vmatpush.msra.mxu0 %v495
    %542 = vmatpush.msra.mxu0 %v492
    %543 = vmatpush.msra.mxu0 %v489
    %544 = vmatpush.msra.mxu0 %v486
    %545 = vmatpush.msra.mxu0 %v483
    %546 = vmatpush.msra.mxu0 %v480
    %547 = vmatmul.f32.gmra.mxu0 %v509
    %v548 = vpop.f32.mrf.mxu0
    %v549 = vadd.f32 %v506, %v548
    %550 = vdwg.mxu0
    %551 = vmatpush.msra.mxu0 0.0
    %552 = vmatpush.msra.mxu0 0.0
    %553 = vmatpush.msra.mxu0 0.0
    %554 = vmatpush.msra.mxu0 0.0
    %555 = vmatpush.msra.mxu0 0.0
    %556 = vmatpush.msra.mxu0 0.0
    %557 = vmatpush.msra.mxu0 0.0
    %558 = vmatpush.msra.mxu0 0.0
    %559 = vmatpush.msra.mxu0 %v502
    %560 = vmatpush.msra.mxu0 %v499
    %561 = vmatpush.msra.mxu0 %v496
    %562 = vmatpush.msra.mxu0 %v493
    %563 = vmatpush.msra.mxu0 %v490
    %564 = vmatpush.msra.mxu0 %v487
    %565 = vmatpush.msra.mxu0 %v484
    %566 = vmatpush.msra.mxu0 %v481
    %567 = vmatmul.f32.gmra.mxu0 %v509
    %v568 = vpop.f32.mrf.mxu0
    %v569 = vadd.f32 %v506, %v568
    %570 = vdwg.mxu0
    %571 = vst [vmem:[#allocation7] sm:$0xff] %v529
    %572 = vst [vmem:[#allocation7 + $0x8] sm:$0xff] %v549
    %573 = vst [vmem:[#allocation7 + $0x10] sm:$0xff] %v569
    // Predicated region
    $region18: #{tpu_custom_call.1} parent=1 // pred_check
      _
    $region19: #{tpu_custom_call.1} parent=1 // pred_check_branch
      %575 = sbr.rel (0) target = $region21
    $region20: #{tpu_custom_call.1} parent=1 // pred_region
      %577 = vsyncadd [#allocation4], 0
      %s579 = sshll.u32 [#allocation7], 4
      %s580 = int_to_ptr.vmem [resolvable:$true] %s579
      %s581 = sshll.u32 %s2, 4
      %s582 = int_to_ptr.hbm [resolvable:$true] %s581
      %584 = dma.vmem_to_hbm [thread:$0]  %s580, 384, %s582, [#allocation4]
    $region21: #{tpu_custom_call.1} parent=1 // pred_fallthru
      _
    // Predicated region
    $region22: #{tpu_custom_call.1} parent=1 // pred_check
      _
    $region23: #{tpu_custom_call.1} parent=1 // pred_check_branch
      %586 = sbr.rel (0) target = $region25
    $region24: #{tpu_custom_call.1} parent=1 // pred_region
      %588 = dma.done [#allocation4], 384
    $region25: #{tpu_custom_call.1} parent=1 // pred_fallthru
      _
    %589 = vsyncpa [#allocation3], 1
    %590 = vsyncpa [#allocation6], 1
    %591 = vsyncpa [#allocation4], 1

</llo_original>
